<compile_context>
chip_gen: v6e
topology: v6e:2x2x1
jax: 0.10.0
libtpu: 0.0.40
codegen_flags: <defaults>
</compile_context>

<pallas_src>
import functools
import math

import jax
import jax.numpy as jnp
from jax.experimental import pallas as pl
from jax.experimental.pallas import tpu as pltpu

# ---- MelSpectrogram hyper-parameters (torchaudio defaults) ----
SAMPLE_RATE = 16000
N_MELS = 80
HOP_LENGTH = 160
N_FFT = 400
N_FREQS = N_FFT // 2 + 1          # 201 (onesided)
F_MIN = 0.0
F_MAX = SAMPLE_RATE / 2.0         # 8000.0

# ---- TPU-friendly padded sizes (zero padding => identical math) ----
NFFT_PAD = 512                    # 400 -> 512  (lane-aligned contraction dim)
NFREQ_PAD = 256                   # 201 -> 256
NMEL_PAD = 128                    # 80  -> 128  (lane-dense output)
TM_MAX = 512                      # frame-rows per grid step (multiple of 128)


def _ceil_to(a, b):
    return (a + b - 1) // b * b


def _hz_to_mel(f):
    return 2595.0 * jnp.log10(1.0 + f / 700.0)


def _mel_to_hz(m):
    return 700.0 * (10.0 ** (m / 2595.0) - 1.0)


def make_constants():
    """Deterministic 'parameters': fused windowed-DFT matrix + HTK mel filterbank."""
    # periodic Hann window (torch.hann_window default)
    n = jnp.arange(N_FFT, dtype=jnp.float32)
    window = 0.5 - 0.5 * jnp.cos(2.0 * math.pi * n / N_FFT)

    # real DFT matrices with the window folded in
    k = jnp.arange(N_FREQS, dtype=jnp.float32)
    ang = 2.0 * math.pi * n[:, None] * k[None, :] / N_FFT       # (400, 201)
    cos_mat = window[:, None] * jnp.cos(ang)
    sin_mat = window[:, None] * jnp.sin(ang)

    # HTK mel filterbank, norm=None (torchaudio melscale_fbanks)
    all_freqs = jnp.linspace(0.0, SAMPLE_RATE // 2, N_FREQS)    # (201,)
    m_pts = jnp.linspace(_hz_to_mel(F_MIN), _hz_to_mel(F_MAX), N_MELS + 2)
    f_pts = _mel_to_hz(m_pts)                                   # (82,)
    f_diff = f_pts[1:] - f_pts[:-1]                             # (81,)
    slopes = f_pts[None, :] - all_freqs[:, None]                # (201, 82)
    down = (-slopes[:, :-2]) / f_diff[:-1]
    up = slopes[:, 2:] / f_diff[1:]
    fb = jnp.maximum(0.0, jnp.minimum(down, up))                # (201, 80)

    # pad to TPU-friendly shapes (zeros contribute nothing) and fuse cos|sin
    cos_p = jnp.pad(cos_mat, ((0, NFFT_PAD - N_FFT), (0, NFREQ_PAD - N_FREQS)))
    sin_p = jnp.pad(sin_mat, ((0, NFFT_PAD - N_FFT), (0, NFREQ_PAD - N_FREQS)))
    cossin_p = jnp.concatenate([cos_p, sin_p], axis=1)          # (512, 512)
    fb_p = jnp.pad(fb, ((0, NFREQ_PAD - N_FREQS), (0, NMEL_PAD - N_MELS)))
    return cossin_p, fb_p


def melspec_kernel(frames_ref, cossin_ref, fb_ref, out_ref):
    # frames_ref: (TM, 512); cossin_ref: (512, 512); fb_ref: (256, 128)
    f = frames_ref[...]
    spec = jnp.dot(f, cossin_ref[...], preferred_element_type=jnp.float32)  # (TM, 512)
    re = spec[:, :NFREQ_PAD]          # lane-aligned slice [0:256)
    im = spec[:, NFREQ_PAD:]          # lane-aligned slice [256:512)
    power = re * re + im * im         # |STFT|^2  (power=2.0)
    out_ref[...] = jnp.dot(power, fb_ref[...], preferred_element_type=jnp.float32)


def _extract_frames(x):
    """(B, T) waveform -> (B*n_frames, N_FFT) overlapped frames (center/reflect)."""
    B, T = x.shape
    n_frames = 1 + T // HOP_LENGTH
    pad = N_FFT // 2
    xp = jnp.pad(x.astype(jnp.float32), ((0, 0), (pad, pad)), mode="reflect")

    # hop-chunk trick: frame i = [chunk_i | chunk_{i+1} | chunk_{i+2}[:80]]
    # (400 = 160 + 160 + 80), so framing is reshape + slices + concat (no gather).
    n_chunks = n_frames + 2
    need = n_chunks * HOP_LENGTH
    cur = xp.shape[1]
    if cur < need:
        xp = jnp.pad(xp, ((0, 0), (0, need - cur)))   # padding is never read
    else:
        xp = xp[:, :need]                              # tail is never read
    chunks = xp.reshape(B, n_chunks, HOP_LENGTH)
    frames = jnp.concatenate(
        [chunks[:, :n_frames],
         chunks[:, 1:n_frames + 1],
         chunks[:, 2:n_frames + 2, : N_FFT - 2 * HOP_LENGTH]],
        axis=-1)                                       # (B, n_frames, 400)
    return frames.reshape(B * n_frames, N_FFT), n_frames


@functools.partial(jax.jit)
def mel_spec(x):
    """x: (B, T) float32 waveform -> (B, n_mels, n_frames) float32."""
    B, _ = x.shape
    frames, n_frames = _extract_frames(x)              # (M, 400)

    M = B * n_frames
    tm = min(TM_MAX, max(8, _ceil_to(M, 8)))           # big tiles; tiny-input friendly
    m_pad = _ceil_to(M, tm)
    frames_p = jnp.pad(frames, ((0, m_pad - M), (0, NFFT_PAD - N_FFT)))

    cossin_p, fb_p = make_constants()

    flops = (2 * m_pad * NFFT_PAD * 2 * NFREQ_PAD      # frames @ cos|sin
             + 3 * m_pad * NFREQ_PAD                   # |.|^2
             + 2 * m_pad * NFREQ_PAD * NMEL_PAD)       # power @ mel_fb
    bytes_accessed = 4 * (m_pad * NFFT_PAD + NFFT_PAD * 2 * NFREQ_PAD
                          + NFREQ_PAD * NMEL_PAD + m_pad * NMEL_PAD)

    out = pl.pallas_call(
        melspec_kernel,
        out_shape=jax.ShapeDtypeStruct((m_pad, NMEL_PAD), jnp.float32),
        grid_spec=pltpu.PrefetchScalarGridSpec(
            num_scalar_prefetch=0,
            grid=(m_pad // tm,),
            in_specs=[
                pl.BlockSpec((tm, NFFT_PAD), lambda i: (i, 0)),
                pl.BlockSpec((NFFT_PAD, 2 * NFREQ_PAD), lambda i: (0, 0)),
                pl.BlockSpec((NFREQ_PAD, NMEL_PAD), lambda i: (0, 0)),
            ],
            out_specs=pl.BlockSpec((tm, NMEL_PAD), lambda i: (i, 0)),
        ),
        compiler_params=pltpu.CompilerParams(
            dimension_semantics=("parallel",)),
        cost_estimate=pl.CostEstimate(
            flops=flops, transcendentals=0, bytes_accessed=bytes_accessed),
    )(frames_p, cossin_p, fb_p)

    mel = out[:M, :N_MELS].reshape(B, n_frames, N_MELS)
    return jnp.transpose(mel, (0, 2, 1))                # (B, n_mels, n_frames)


def mel_spec_ref(x):
    """Pure-JAX reference (direct gather framing, unfused DFT) for a sanity check."""
    B, T = x.shape
    n_frames = 1 + T // HOP_LENGTH
    pad = N_FFT // 2
    xp = jnp.pad(x.astype(jnp.float32), ((0, 0), (pad, pad)), mode="reflect")
    starts = jnp.arange(n_frames) * HOP_LENGTH
    idx = starts[:, None] + jnp.arange(N_FFT)[None, :]
    frames = xp[:, idx]                                 # (B, n_frames, 400)
    cossin_p, fb_p = make_constants()
    cos_m = cossin_p[:N_FFT, :N_FREQS]
    sin_m = cossin_p[:N_FFT, NFREQ_PAD:NFREQ_PAD + N_FREQS]
    fb = fb_p[:N_FREQS, :N_MELS]
    re = jnp.einsum("bfn,nk->bfk", frames, cos_m)
    im = jnp.einsum("bfn,nk->bfk", frames, sin_m)
    power = re * re + im * im
    mel = jnp.einsum("bfk,km->bfm", power, fb)
    return jnp.transpose(mel, (0, 2, 1))


if __name__ == "__main__":
    key = jax.random.PRNGKey(0)
    # small input consistent with the module: batch=2 waveforms, 2048 samples
    x = jax.random.normal(key, (2, 2048), dtype=jnp.float32)

    out = jax.block_until_ready(mel_spec(x))
    ref = jax.block_until_ready(mel_spec_ref(x))

    assert out.shape == (2, N_MELS, 1 + 2048 // HOP_LENGTH), out.shape
    assert jnp.allclose(out, ref, rtol=1e-3, atol=1e-3), float(jnp.max(jnp.abs(out - ref)))

    print("KERNEL_OK")
</pallas_src>

<mosaic_0001>
module attributes {stable_mosaic.version = 11 : i64} {
  func.func @melspec_kernel(%arg0: i32, %arg1: memref<32x512xf32, #tpu.memory_space<vmem>>, %arg2: memref<512x512xf32, #tpu.memory_space<vmem>>, %arg3: memref<256x128xf32, #tpu.memory_space<vmem>>, %arg4: memref<32x128xf32, #tpu.memory_space<vmem>>) attributes {dimension_semantics = [#tpu.dimension_semantics<parallel>], iteration_bounds = array<i64: 1>, scalar_prefetch = 0 : i64, scratch_operands = 0 : i64, tpu.core_type = #tpu.core_type<tc>, window_params = [{transform_indices = @transform_0, window_bounds = array<i64: 32, 512>}, {pipeline_mode = #tpu.pipeline_mode<synchronous>, transform_indices = @transform_1, window_bounds = array<i64: 512, 512>}, {pipeline_mode = #tpu.pipeline_mode<synchronous>, transform_indices = @transform_2, window_bounds = array<i64: 256, 128>}, {transform_indices = @transform_3, window_bounds = array<i64: 32, 128>}]} {
    %c0 = arith.constant 0 : index
    %c0_0 = arith.constant 0 : index
    %0 = vector.load %arg1[%c0, %c0_0] : memref<32x512xf32, #tpu.memory_space<vmem>>, vector<32x512xf32>
    %c0_1 = arith.constant 0 : index
    %c0_2 = arith.constant 0 : index
    %1 = vector.load %arg2[%c0_1, %c0_2] : memref<512x512xf32, #tpu.memory_space<vmem>>, vector<512x512xf32>
    %cst = arith.constant dense<0.000000e+00> : vector<32x512xf32>
    %2 = tpu.matmul %0, %1, %cst {dimension_numbers = #tpu.dot_dimension_numbers<[1], [0], [0], [1], [0, 0, 1, 1], [], []>} : vector<32x512xf32>, vector<512x512xf32>, vector<32x512xf32> -> vector<32x512xf32>
    %3 = vector.extract_strided_slice %2 {offsets = [0, 0], sizes = [32, 256], strides = [1, 1]} : vector<32x512xf32> to vector<32x256xf32>
    %4 = vector.extract_strided_slice %2 {offsets = [0, 256], sizes = [32, 256], strides = [1, 1]} : vector<32x512xf32> to vector<32x256xf32>
    %5 = arith.mulf %3, %3 : vector<32x256xf32>
    %6 = arith.mulf %4, %4 : vector<32x256xf32>
    %7 = arith.addf %5, %6 : vector<32x256xf32>
    %c0_3 = arith.constant 0 : index
    %c0_4 = arith.constant 0 : index
    %8 = vector.load %arg3[%c0_3, %c0_4] : memref<256x128xf32, #tpu.memory_space<vmem>>, vector<256x128xf32>
    %cst_5 = arith.constant dense<0.000000e+00> : vector<32x128xf32>
    %9 = tpu.matmul %7, %8, %cst_5 {dimension_numbers = #tpu.dot_dimension_numbers<[1], [0], [0], [1], [0, 0, 1, 1], [], []>} : vector<32x256xf32>, vector<256x128xf32>, vector<32x128xf32> -> vector<32x128xf32>
    %c0_6 = arith.constant 0 : index
    %c0_7 = arith.constant 0 : index
    %10 = vector.load %arg4[%c0_6, %c0_7] : memref<32x128xf32, #tpu.memory_space<vmem>>, vector<32x128xf32>
    tpu.vector_store %arg4[%c0_6, %c0_7], %9 {strides = array<i32>} : memref<32x128xf32, #tpu.memory_space<vmem>>, vector<32x128xf32>,
    return
  }
  func.func @transform_0(%arg0: i32) -> (i32, i32) {
    %c0_i32 = arith.constant 0 : i32
    %c0_i32_0 = arith.constant 0 : i32
    return %arg0, %c0_i32 : i32, i32
  }
  func.func @transform_1(%arg0: i32) -> (i32, i32) {
    %c0_i32 = arith.constant 0 : i32
    %c0_i32_0 = arith.constant 0 : i32
    %c0_i32_1 = arith.constant 0 : i32
    return %c0_i32, %c0_i32_0 : i32, i32
  }
  func.func @transform_2(%arg0: i32) -> (i32, i32) {
    %c0_i32 = arith.constant 0 : i32
    %c0_i32_0 = arith.constant 0 : i32
    %c0_i32_1 = arith.constant 0 : i32
    return %c0_i32, %c0_i32_0 : i32, i32
  }
  func.func @transform_3(%arg0: i32) -> (i32, i32) {
    %c0_i32 = arith.constant 0 : i32
    %c0_i32_0 = arith.constant 0 : i32
    return %arg0, %c0_i32 : i32, i32
  }
}

</mosaic_0001>

<llo_original>
// kernel: reverse
$region0: #{reverse}
  %s0 = inlined_call_operand.vmem [shape: f32[2,256], index: 0, kind: input, shape index: {}]
  %s1 = inlined_call_operand.vmem [shape: f32[2,256], index: 1, kind: output, shape index: {}]
  %v2 = vlaneseq
  %v3 = vsub.s32 127, %v2
  %4 = vset.pattern.permute.xlu0 %v3
  $region1: #{reverse} parent=0
    #allocation0 [shape = 'u8[4096]{0}', space=vmem, size = 0x1000, scoped, tag = 'operand span for operand 0']
    #allocation1 [shape = 'u8[2048]{0}', space=vmem, size = 0x800, scoped, tag = 'packed  for operand 0']
    #allocation2 [shape = 'u8[4096]{0}', space=vmem, size = 0x1000, scoped, tag = 'operand span for operand 1']
    #allocation3 [shape = 'u8[2048]{0}', space=vmem, size = 0x800, scoped, tag = 'packed  for operand 1']
    loop: start=0, step=1, limit=4
    $region2: #{reverse} parent=1 // loop_pre_header
      _
    $region3: #{reverse} parent=1 // loop_header
      %s6 = sphi 0, %s10
      %p7 = scmp.ge.s32.totalorder %s6, 4
      %s13 = sphi 0, %s25
      %s14 = sphi 0, %s21
      %s15 = sphi 0, %s13
      %s16 = sphi 0, %s14
      %s17 = sphi 0, %s15
      %s18 = sphi 0, %s16
    $region4: #{reverse} parent=1 // loop_header_branch
      %9 = sbr.rel (%p7) target = $region8
    $region5: #{reverse} parent=1 // loop_body
      %s11 = ssub.s32 %s6, 1
      %s12 = ssub.s32 %s6, 2
      %s19 = sadd.s32 1, %s14
      %p20 = scmp.ge.s32.totalorder %s19, 2
      %s21 = scalar_select %p20, 0, %s19
      %s22 = sadd.s32 1, %s13
      %s23 = scalar_select %p20, %s22, %s13
      %p24 = scmp.ge.s32.totalorder %s23, 1
      %s25 = scalar_select %p24, 0, %s23
      %p26 = scmp.le.s32.totalorder 1, %s6
      %p27 = scmp.lt.s32.totalorder %s6, 3
      %p28 = pnand %p26, %p27
      %p29 = pneg %p28
      // Predicated region
      $region9: #{reverse} parent=5 // pred_check
        _
      $region10: #{reverse} parent=5 // pred_check_branch
        %31 = sbr.rel (%p28) target = $region12
      $region11: #{reverse} parent=5 // pred_region
        %s32 = ssub.s32 %s6, 1
      $region12: #{reverse} parent=5 // pred_fallthru
        _
      %p33 = scmp.lt.s32.totalorder %s6, 2
      // Predicated region
      $region13: #{reverse} parent=5 // pred_check
        %p34 = pneg %p33
      $region14: #{reverse} parent=5 // pred_check_branch
        %36 = sbr.rel (%p34) target = $region16
      $region15: #{reverse} parent=5 // pred_region
        %s37 = sand.u32 %s6, 1
        %s38 = sand.u32 %s6, 1
        %s39 = smul.addr %s38, 2
        %s40 = scalar_lea.vmem [#allocation1], %s39
        %s41 = ssub.s32 1, %s14
        %s42 = smul.addr %s13, 2
        %s43 = sadd.s32 %s41, %s42
        %s44 = smul.addr %s43, 2
        %s45 = scalar_lea.vmem %s0, %s44
        // Predicated region
        $region17: #{reverse} parent=15 // pred_check
          _
        $region18: #{reverse} parent=15 // pred_check_branch
          %47 = sbr.rel (0) target = $region20
        $region19: #{reverse} parent=15 // pred_region
          // Predicated region
          $region21: #{reverse} parent=19 // pred_check
            _
          $region22: #{reverse} parent=19 // pred_check_branch
            %49 = sbr.rel target = $region24
          $region23: #{reverse} parent=19 // pred_region
            // Predicated region
            $region36: #{reverse} parent=23 // pred_check
              _
            $region37: #{reverse} parent=23 // pred_check_branch
              %65 = sbr.rel (0) target = $region39
            $region38: #{reverse} parent=23 // pred_region
              %s67 = ssub.s32 4, 1
              loop: start=0, step=1, limit=1
              $region40: #{reverse} parent=38 // loop_pre_header
                _
              $region41: #{reverse} parent=38 // loop_header
                %s69 = sphi 0, %s73
                %p70 = scmp.ge.s32.totalorder %s69, 1
                %s74 = sphi %s45, %s45
                %s75 = sphi %s40, %s40
              $region42: #{reverse} parent=38 // loop_header_branch
                %72 = sbr.rel (%p70) target = $region46
              $region43: #{reverse} parent=38 // loop_body
                %v76 = vld [vmem:[%s74] sm:%s67]
                %77 = vst [vmem:[%s75] sm:%s67] %v76
              $region44: #{reverse} parent=38 // loop_footer
                %s73 = sadd.s32 1, %s69
              $region45: #{reverse} parent=38 // loop_footer_branch
                %68 = sbr.rel target = $region41
              $region46: #{reverse} parent=38 // loop_exit
                _
            $region39: #{reverse} parent=23 // pred_fallthru
              _
          $region24: #{reverse} parent=19 // pred_fallthru
            _
          // Predicated region
          $region25: #{reverse} parent=19 // pred_check
            _
          $region26: #{reverse} parent=19 // pred_check_branch
            %51 = sbr.rel (0) target = $region28
          $region27: #{reverse} parent=19 // pred_region
            %s53 = ssub.s32 4, 1
            loop: start=0, step=1, limit=1
            $region29: #{reverse} parent=27 // loop_pre_header
              _
            $region30: #{reverse} parent=27 // loop_header
              %s55 = sphi 0, %s59
              %p56 = scmp.ge.s32.totalorder %s55, 1
              %s60 = sphi %s45, %s45
              %s61 = sphi %s40, %s40
            $region31: #{reverse} parent=27 // loop_header_branch
              %58 = sbr.rel (%p56) target = $region35
            $region32: #{reverse} parent=27 // loop_body
              %v62 = vld [vmem:[%s60] sm:%s53]
              %63 = vst [vmem:[%s61] sm:%s53] %v62
            $region33: #{reverse} parent=27 // loop_footer
              %s59 = sadd.s32 1, %s55
            $region34: #{reverse} parent=27 // loop_footer_branch
              %54 = sbr.rel target = $region30
            $region35: #{reverse} parent=27 // loop_exit
              _
          $region28: #{reverse} parent=19 // pred_fallthru
            _
        $region20: #{reverse} parent=15 // pred_fallthru
          _
        %78 = vnop
      $region16: #{reverse} parent=5 // pred_fallthru
        _
      %p79 = scmp.le.s32.totalorder 1, %s6
      %p80 = scmp.lt.s32.totalorder %s6, 3
      %p81 = pnand %p79, %p80
      %p82 = pneg %p81
      // Predicated region
      $region47: #{reverse} parent=5 // pred_check
        _
      $region48: #{reverse} parent=5 // pred_check_branch
        %84 = sbr.rel (%p81) target = $region50
      $region49: #{reverse} parent=5 // pred_region
        %s85 = ssub.s32 %s6, 1
        %s86 = sand.u32 %s11, 1
        %s87 = sand.u32 %s11, 1
        %s88 = smul.addr %s87, 2
        %s89 = scalar_lea.vmem [#allocation1], %s88
        %s90 = sand.u32 %s11, 1
        %s91 = sand.u32 %s11, 1
        %s92 = smul.addr %s91, 2
        %s93 = scalar_lea.vmem [#allocation1], %s92
        %s94 = sand.u32 %s11, 1
        %s95 = sand.u32 %s11, 1
        %s96 = smul.addr %s95, 2
        %s97 = scalar_lea.vmem [#allocation3], %s96
        %s99 = sshll.u32 1, 2
        %s100 = ssub.s32 %s99, 1
        %v101 = vld [vmem:[%s93] sm:%s100]
        %102 = vst [vmem:[#allocation0] sm:%s100] %v101
        %s103 = ssub.s32 1, %s16
        %v104 = vld [vmem:[#allocation0] sm:$0xff]
        %105 = vperm.xlu0 %4, %v104
        %v106 = vpop.permute.xlu0 %105
        %107 = vst [vmem:[#allocation2] sm:$0xff] %v106
        %s109 = sshll.u32 1, 2
        %s110 = ssub.s32 %s109, 1
        %v112 = vld [vmem:[#allocation2] sm:%s110]
        %s113 = sshll.u32 1, 2
        %s114 = ssub.s32 %s113, 1
        %115 = vst [vmem:[%s97] sm:%s114] %v112
        %s116 = sand.u32 %s11, 1
        %s117 = sand.u32 %s11, 1
        %s118 = smul.addr %s117, 2
        %s119 = scalar_lea.vmem [#allocation3], %s118
        %s120 = smul.addr %s15, 2
        %s121 = sadd.s32 %s16, %s120
        %s122 = smul.addr %s121, 2
        %s123 = scalar_lea.vmem %s1, %s122
        // Predicated region
        $region51: #{reverse} parent=49 // pred_check
          _
        $region52: #{reverse} parent=49 // pred_check_branch
          %125 = sbr.rel (0) target = $region54
        $region53: #{reverse} parent=49 // pred_region
          // Predicated region
          $region55: #{reverse} parent=53 // pred_check
            _
          $region56: #{reverse} parent=53 // pred_check_branch
            %127 = sbr.rel target = $region58
          $region57: #{reverse} parent=53 // pred_region
            // Predicated region
            $region70: #{reverse} parent=57 // pred_check
              _
            $region71: #{reverse} parent=57 // pred_check_branch
              %143 = sbr.rel (0) target = $region73
            $region72: #{reverse} parent=57 // pred_region
              %s145 = ssub.s32 4, 1
              loop: start=0, step=1, limit=1
              $region74: #{reverse} parent=72 // loop_pre_header
                _
              $region75: #{reverse} parent=72 // loop_header
                %s147 = sphi 0, %s151
                %p148 = scmp.ge.s32.totalorder %s147, 1
                %s152 = sphi %s119, %s119
                %s153 = sphi %s123, %s123
              $region76: #{reverse} parent=72 // loop_header_branch
                %150 = sbr.rel (%p148) target = $region80
              $region77: #{reverse} parent=72 // loop_body
                %v154 = vld [vmem:[%s152] sm:%s145]
                %155 = vst [vmem:[%s153] sm:%s145] %v154
              $region78: #{reverse} parent=72 // loop_footer
                %s151 = sadd.s32 1, %s147
              $region79: #{reverse} parent=72 // loop_footer_branch
                %146 = sbr.rel target = $region75
              $region80: #{reverse} parent=72 // loop_exit
                _
            $region73: #{reverse} parent=57 // pred_fallthru
              _
          $region58: #{reverse} parent=53 // pred_fallthru
            _
          // Predicated region
          $region59: #{reverse} parent=53 // pred_check
            _
          $region60: #{reverse} parent=53 // pred_check_branch
            %129 = sbr.rel (0) target = $region62
          $region61: #{reverse} parent=53 // pred_region
            %s131 = ssub.s32 4, 1
            loop: start=0, step=1, limit=1
            $region63: #{reverse} parent=61 // loop_pre_header
              _
            $region64: #{reverse} parent=61 // loop_header
              %s133 = sphi 0, %s137
              %p134 = scmp.ge.s32.totalorder %s133, 1
              %s138 = sphi %s119, %s119
              %s139 = sphi %s123, %s123
            $region65: #{reverse} parent=61 // loop_header_branch
              %136 = sbr.rel (%p134) target = $region69
            $region66: #{reverse} parent=61 // loop_body
              %v140 = vld [vmem:[%s138] sm:%s131]
              %141 = vst [vmem:[%s139] sm:%s131] %v140
            $region67: #{reverse} parent=61 // loop_footer
              %s137 = sadd.s32 1, %s133
            $region68: #{reverse} parent=61 // loop_footer_branch
              %132 = sbr.rel target = $region64
            $region69: #{reverse} parent=61 // loop_exit
              _
          $region62: #{reverse} parent=53 // pred_fallthru
            _
        $region54: #{reverse} parent=49 // pred_fallthru
          _
        %156 = vnop
      $region50: #{reverse} parent=5 // pred_fallthru
        _
      %p157 = scmp.le.s32.totalorder 2, %s6
      // Predicated region
      $region81: #{reverse} parent=5 // pred_check
        %p158 = pneg %p157
      $region82: #{reverse} parent=5 // pred_check_branch
        %160 = sbr.rel (%p158) target = $region84
      $region83: #{reverse} parent=5 // pred_region
        %s161 = ssub.s32 %s6, 2
        %s162 = sand.u32 %s12, 1
        %s163 = sand.u32 %s12, 1
        %s164 = smul.addr %s163, 2
        %s165 = scalar_lea.vmem [#allocation3], %s164
      $region84: #{reverse} parent=5 // pred_fallthru
        _
    $region6: #{reverse} parent=1 // loop_footer
      %s10 = sadd.s32 1, %s6
    $region7: #{reverse} parent=1 // loop_footer_branch
      %5 = sbr.rel target = $region3
    $region8: #{reverse} parent=1 // loop_exit
      _

// kernel: mel_spec.1
$region0: #{mel_spec.1}
  #allocation0 [shape = 'u32[]', space=smem, size = 0x4, offset = 0x4, fixed_abs, tag = 'smem constant byte address 0x4 - core index']
  #allocation1 [shape = 'u32[144,128]{1,0:T(1,128)}', space=vmem, size = 0x12000, scoped, tag = 'internal scratch']
  %s0 = inlined_call_operand.vmem [shape: f32[32,512], index: 0, kind: input, shape index: {}]
  %s1 = inlined_call_operand.vmem [shape: f32[512,512], index: 1, kind: input, shape index: {}]
  %s2 = inlined_call_operand.vmem [shape: f32[256,128], index: 2, kind: input, shape index: {}]
  %s3 = inlined_call_operand.vmem [shape: f32[32,128], index: 3, kind: output, shape index: {}]
  %s4 = sld [smem:[#allocation0]]
  $region22: #{mel_spec.1} parent=0
    _
  %s6 = ssub.s32 1, %s4
  %s7 = scalar_select 0, %s6, %s4
  // Predicated region
  $region2: #{mel_spec.1} parent=0 // pred_check
    _
  $region3: #{mel_spec.1} parent=0 // pred_check_branch
    %9 = sbr.rel (0) target = $region5
  $region4: #{mel_spec.1} parent=0 // pred_region
    _
  $region5: #{mel_spec.1} parent=0 // pred_fallthru
    _
  // Predicated region
  $region6: #{mel_spec.1} parent=0 // pred_check
    _
  $region7: #{mel_spec.1} parent=0 // pred_check_branch
    %11 = sbr.rel (0) target = $region9
  $region8: #{mel_spec.1} parent=0 // pred_region
    _
  $region9: #{mel_spec.1} parent=0 // pred_fallthru
    _
  // Predicated region
  $region10: #{mel_spec.1} parent=0 // pred_check
    _
  $region11: #{mel_spec.1} parent=0 // pred_check_branch
    %13 = sbr.rel (0) target = $region13
  $region12: #{mel_spec.1} parent=0 // pred_region
    _
  $region13: #{mel_spec.1} parent=0 // pred_fallthru
    _
  %v14 = vld [vmem:[%s0] sm:$0xff]
  %v15 = vld [vmem:[%s0 + $0x8] sm:$0xff]
  %v16 = vld [vmem:[%s0 + $0x10] sm:$0xff]
  %v17 = vld [vmem:[%s0 + $0x18] sm:$0xff]
  %v18 = vld [vmem:[%s0 + $0x20] sm:$0xff]
  %v19 = vld [vmem:[%s0 + $0x28] sm:$0xff]
  %v20 = vld [vmem:[%s0 + $0x30] sm:$0xff]
  %v21 = vld [vmem:[%s0 + $0x38] sm:$0xff]
  %v22 = vld [vmem:[%s0 + $0x40] sm:$0xff]
  %v23 = vld [vmem:[%s0 + $0x48] sm:$0xff]
  %v24 = vld [vmem:[%s0 + $0x50] sm:$0xff]
  %v25 = vld [vmem:[%s0 + $0x58] sm:$0xff]
  %v26 = vld [vmem:[%s0 + $0x60] sm:$0xff]
  %v27 = vld [vmem:[%s0 + $0x68] sm:$0xff]
  %v28 = vld [vmem:[%s0 + $0x70] sm:$0xff]
  %v29 = vld [vmem:[%s0 + $0x78] sm:$0xff]
  %v30 = vld [vmem:[%s1] sm:$0xff]
  %v31 = vld [vmem:[%s1 + $0x8] sm:$0xff]
  %v32 = vld [vmem:[%s1 + $0x10] sm:$0xff]
  %v33 = vld [vmem:[%s1 + $0x18] sm:$0xff]
  %v34 = vld [vmem:[%s1 + $0x20] sm:$0xff]
  %v35 = vld [vmem:[%s1 + $0x28] sm:$0xff]
  %v36 = vld [vmem:[%s1 + $0x30] sm:$0xff]
  %v37 = vld [vmem:[%s1 + $0x38] sm:$0xff]
  %v38 = vld [vmem:[%s1 + $0x40] sm:$0xff]
  %v39 = vld [vmem:[%s1 + $0x48] sm:$0xff]
  %v40 = vld [vmem:[%s1 + $0x50] sm:$0xff]
  %v41 = vld [vmem:[%s1 + $0x58] sm:$0xff]
  %v42 = vld [vmem:[%s1 + $0x60] sm:$0xff]
  %v43 = vld [vmem:[%s1 + $0x68] sm:$0xff]
  %v44 = vld [vmem:[%s1 + $0x70] sm:$0xff]
  %v45 = vld [vmem:[%s1 + $0x78] sm:$0xff]
  %v46 = vld [vmem:[%s1 + $0x80] sm:$0xff]
  %v47 = vld [vmem:[%s1 + $0x88] sm:$0xff]
  %v48 = vld [vmem:[%s1 + $0x90] sm:$0xff]
  %v49 = vld [vmem:[%s1 + $0x98] sm:$0xff]
  %v50 = vld [vmem:[%s1 + $0xa0] sm:$0xff]
  %v51 = vld [vmem:[%s1 + $0xa8] sm:$0xff]
  %v52 = vld [vmem:[%s1 + $0xb0] sm:$0xff]
  %v53 = vld [vmem:[%s1 + $0xb8] sm:$0xff]
  %v54 = vld [vmem:[%s1 + $0xc0] sm:$0xff]
  %v55 = vld [vmem:[%s1 + $0xc8] sm:$0xff]
  %v56 = vld [vmem:[%s1 + $0xd0] sm:$0xff]
  %v57 = vld [vmem:[%s1 + $0xd8] sm:$0xff]
  %v58 = vld [vmem:[%s1 + $0xe0] sm:$0xff]
  %v59 = vld [vmem:[%s1 + $0xe8] sm:$0xff]
  %v60 = vld [vmem:[%s1 + $0xf0] sm:$0xff]
  %v61 = vld [vmem:[%s1 + $0xf8] sm:$0xff]
  %v62 = vld [vmem:[%s1 + $0x100] sm:$0xff]
  %v63 = vld [vmem:[%s1 + $0x108] sm:$0xff]
  %v64 = vld [vmem:[%s1 + $0x110] sm:$0xff]
  %v65 = vld [vmem:[%s1 + $0x118] sm:$0xff]
  %v66 = vld [vmem:[%s1 + $0x120] sm:$0xff]
  %v67 = vld [vmem:[%s1 + $0x128] sm:$0xff]
  %v68 = vld [vmem:[%s1 + $0x130] sm:$0xff]
  %v69 = vld [vmem:[%s1 + $0x138] sm:$0xff]
  %v70 = vld [vmem:[%s1 + $0x140] sm:$0xff]
  %v71 = vld [vmem:[%s1 + $0x148] sm:$0xff]
  %v72 = vld [vmem:[%s1 + $0x150] sm:$0xff]
  %v73 = vld [vmem:[%s1 + $0x158] sm:$0xff]
  %v74 = vld [vmem:[%s1 + $0x160] sm:$0xff]
  %v75 = vld [vmem:[%s1 + $0x168] sm:$0xff]
  %v76 = vld [vmem:[%s1 + $0x170] sm:$0xff]
  %v77 = vld [vmem:[%s1 + $0x178] sm:$0xff]
  %v78 = vld [vmem:[%s1 + $0x180] sm:$0xff]
  %v79 = vld [vmem:[%s1 + $0x188] sm:$0xff]
  %v80 = vld [vmem:[%s1 + $0x190] sm:$0xff]
  %v81 = vld [vmem:[%s1 + $0x198] sm:$0xff]
  %v82 = vld [vmem:[%s1 + $0x1a0] sm:$0xff]
  %v83 = vld [vmem:[%s1 + $0x1a8] sm:$0xff]
  %v84 = vld [vmem:[%s1 + $0x1b0] sm:$0xff]
  %v85 = vld [vmem:[%s1 + $0x1b8] sm:$0xff]
  %v86 = vld [vmem:[%s1 + $0x1c0] sm:$0xff]
  %v87 = vld [vmem:[%s1 + $0x1c8] sm:$0xff]
  %v88 = vld [vmem:[%s1 + $0x1d0] sm:$0xff]
  %v89 = vld [vmem:[%s1 + $0x1d8] sm:$0xff]
  %v90 = vld [vmem:[%s1 + $0x1e0] sm:$0xff]
  %v91 = vld [vmem:[%s1 + $0x1e8] sm:$0xff]
  %v92 = vld [vmem:[%s1 + $0x1f0] sm:$0xff]
  %v93 = vld [vmem:[%s1 + $0x1f8] sm:$0xff]
  %v94 = vld [vmem:[%s1 + $0x200] sm:$0xff]
  %v95 = vld [vmem:[%s1 + $0x208] sm:$0xff]
  %v96 = vld [vmem:[%s1 + $0x210] sm:$0xff]
  %v97 = vld [vmem:[%s1 + $0x218] sm:$0xff]
  %v98 = vld [vmem:[%s1 + $0x220] sm:$0xff]
  %v99 = vld [vmem:[%s1 + $0x228] sm:$0xff]
  %v100 = vld [vmem:[%s1 + $0x230] sm:$0xff]
  %v101 = vld [vmem:[%s1 + $0x238] sm:$0xff]
  %v102 = vld [vmem:[%s1 + $0x240] sm:$0xff]
  %v103 = vld [vmem:[%s1 + $0x248] sm:$0xff]
  %v104 = vld [vmem:[%s1 + $0x250] sm:$0xff]
  %v105 = vld [vmem:[%s1 + $0x258] sm:$0xff]
  %v106 = vld [vmem:[%s1 + $0x260] sm:$0xff]
  %v107 = vld [vmem:[%s1 + $0x268] sm:$0xff]
  %v108 = vld [vmem:[%s1 + $0x270] sm:$0xff]
  %v109 = vld [vmem:[%s1 + $0x278] sm:$0xff]
  %v110 = vld [vmem:[%s1 + $0x280] sm:$0xff]
  %v111 = vld [vmem:[%s1 + $0x288] sm:$0xff]
  %v112 = vld [vmem:[%s1 + $0x290] sm:$0xff]
  %v113 = vld [vmem:[%s1 + $0x298] sm:$0xff]
  %v114 = vld [vmem:[%s1 + $0x2a0] sm:$0xff]
  %v115 = vld [vmem:[%s1 + $0x2a8] sm:$0xff]
  %v116 = vld [vmem:[%s1 + $0x2b0] sm:$0xff]
  %v117 = vld [vmem:[%s1 + $0x2b8] sm:$0xff]
  %v118 = vld [vmem:[%s1 + $0x2c0] sm:$0xff]
  %v119 = vld [vmem:[%s1 + $0x2c8] sm:$0xff]
  %v120 = vld [vmem:[%s1 + $0x2d0] sm:$0xff]
  %v121 = vld [vmem:[%s1 + $0x2d8] sm:$0xff]
  %v122 = vld [vmem:[%s1 + $0x2e0] sm:$0xff]
  %v123 = vld [vmem:[%s1 + $0x2e8] sm:$0xff]
  %v124 = vld [vmem:[%s1 + $0x2f0] sm:$0xff]
  %v125 = vld [vmem:[%s1 + $0x2f8] sm:$0xff]
  %v126 = vld [vmem:[%s1 + $0x300] sm:$0xff]
  %v127 = vld [vmem:[%s1 + $0x308] sm:$0xff]
  %v128 = vld [vmem:[%s1 + $0x310] sm:$0xff]
  %v129 = vld [vmem:[%s1 + $0x318] sm:$0xff]
  %v130 = vld [vmem:[%s1 + $0x320] sm:$0xff]
  %v131 = vld [vmem:[%s1 + $0x328] sm:$0xff]
  %v132 = vld [vmem:[%s1 + $0x330] sm:$0xff]
  %v133 = vld [vmem:[%s1 + $0x338] sm:$0xff]
  %v134 = vld [vmem:[%s1 + $0x340] sm:$0xff]
  %v135 = vld [vmem:[%s1 + $0x348] sm:$0xff]
  %v136 = vld [vmem:[%s1 + $0x350] sm:$0xff]
  %v137 = vld [vmem:[%s1 + $0x358] sm:$0xff]
  %v138 = vld [vmem:[%s1 + $0x360] sm:$0xff]
  %v139 = vld [vmem:[%s1 + $0x368] sm:$0xff]
  %v140 = vld [vmem:[%s1 + $0x370] sm:$0xff]
  %v141 = vld [vmem:[%s1 + $0x378] sm:$0xff]
  %v142 = vld [vmem:[%s1 + $0x380] sm:$0xff]
  %v143 = vld [vmem:[%s1 + $0x388] sm:$0xff]
  %v144 = vld [vmem:[%s1 + $0x390] sm:$0xff]
  %v145 = vld [vmem:[%s1 + $0x398] sm:$0xff]
  %v146 = vld [vmem:[%s1 + $0x3a0] sm:$0xff]
  %v147 = vld [vmem:[%s1 + $0x3a8] sm:$0xff]
  %v148 = vld [vmem:[%s1 + $0x3b0] sm:$0xff]
  %v149 = vld [vmem:[%s1 + $0x3b8] sm:$0xff]
  %v150 = vld [vmem:[%s1 + $0x3c0] sm:$0xff]
  %v151 = vld [vmem:[%s1 + $0x3c8] sm:$0xff]
  %v152 = vld [vmem:[%s1 + $0x3d0] sm:$0xff]
  %v153 = vld [vmem:[%s1 + $0x3d8] sm:$0xff]
  %v154 = vld [vmem:[%s1 + $0x3e0] sm:$0xff]
  %v155 = vld [vmem:[%s1 + $0x3e8] sm:$0xff]
  %v156 = vld [vmem:[%s1 + $0x3f0] sm:$0xff]
  %v157 = vld [vmem:[%s1 + $0x3f8] sm:$0xff]
  %v158 = vld [vmem:[%s1 + $0x400] sm:$0xff]
  %v159 = vld [vmem:[%s1 + $0x408] sm:$0xff]
  %v160 = vld [vmem:[%s1 + $0x410] sm:$0xff]
  %v161 = vld [vmem:[%s1 + $0x418] sm:$0xff]
  %v162 = vld [vmem:[%s1 + $0x420] sm:$0xff]
  %v163 = vld [vmem:[%s1 + $0x428] sm:$0xff]
  %v164 = vld [vmem:[%s1 + $0x430] sm:$0xff]
  %v165 = vld [vmem:[%s1 + $0x438] sm:$0xff]
  %v166 = vld [vmem:[%s1 + $0x440] sm:$0xff]
  %v167 = vld [vmem:[%s1 + $0x448] sm:$0xff]
  %v168 = vld [vmem:[%s1 + $0x450] sm:$0xff]
  %v169 = vld [vmem:[%s1 + $0x458] sm:$0xff]
  %v170 = vld [vmem:[%s1 + $0x460] sm:$0xff]
  %v171 = vld [vmem:[%s1 + $0x468] sm:$0xff]
  %v172 = vld [vmem:[%s1 + $0x470] sm:$0xff]
  %v173 = vld [vmem:[%s1 + $0x478] sm:$0xff]
  %v174 = vld [vmem:[%s1 + $0x480] sm:$0xff]
  %v175 = vld [vmem:[%s1 + $0x488] sm:$0xff]
  %v176 = vld [vmem:[%s1 + $0x490] sm:$0xff]
  %v177 = vld [vmem:[%s1 + $0x498] sm:$0xff]
  %v178 = vld [vmem:[%s1 + $0x4a0] sm:$0xff]
  %v179 = vld [vmem:[%s1 + $0x4a8] sm:$0xff]
  %v180 = vld [vmem:[%s1 + $0x4b0] sm:$0xff]
  %v181 = vld [vmem:[%s1 + $0x4b8] sm:$0xff]
  %v182 = vld [vmem:[%s1 + $0x4c0] sm:$0xff]
  %v183 = vld [vmem:[%s1 + $0x4c8] sm:$0xff]
  %v184 = vld [vmem:[%s1 + $0x4d0] sm:$0xff]
  %v185 = vld [vmem:[%s1 + $0x4d8] sm:$0xff]
  %v186 = vld [vmem:[%s1 + $0x4e0] sm:$0xff]
  %v187 = vld [vmem:[%s1 + $0x4e8] sm:$0xff]
  %v188 = vld [vmem:[%s1 + $0x4f0] sm:$0xff]
  %v189 = vld [vmem:[%s1 + $0x4f8] sm:$0xff]
  %v190 = vld [vmem:[%s1 + $0x500] sm:$0xff]
  %v191 = vld [vmem:[%s1 + $0x508] sm:$0xff]
  %v192 = vld [vmem:[%s1 + $0x510] sm:$0xff]
  %v193 = vld [vmem:[%s1 + $0x518] sm:$0xff]
  %v194 = vld [vmem:[%s1 + $0x520] sm:$0xff]
  %v195 = vld [vmem:[%s1 + $0x528] sm:$0xff]
  %v196 = vld [vmem:[%s1 + $0x530] sm:$0xff]
  %v197 = vld [vmem:[%s1 + $0x538] sm:$0xff]
  %v198 = vld [vmem:[%s1 + $0x540] sm:$0xff]
  %v199 = vld [vmem:[%s1 + $0x548] sm:$0xff]
  %v200 = vld [vmem:[%s1 + $0x550] sm:$0xff]
  %v201 = vld [vmem:[%s1 + $0x558] sm:$0xff]
  %v202 = vld [vmem:[%s1 + $0x560] sm:$0xff]
  %v203 = vld [vmem:[%s1 + $0x568] sm:$0xff]
  %v204 = vld [vmem:[%s1 + $0x570] sm:$0xff]
  %v205 = vld [vmem:[%s1 + $0x578] sm:$0xff]
  %v206 = vld [vmem:[%s1 + $0x580] sm:$0xff]
  %v207 = vld [vmem:[%s1 + $0x588] sm:$0xff]
  %v208 = vld [vmem:[%s1 + $0x590] sm:$0xff]
  %v209 = vld [vmem:[%s1 + $0x598] sm:$0xff]
  %v210 = vld [vmem:[%s1 + $0x5a0] sm:$0xff]
  %v211 = vld [vmem:[%s1 + $0x5a8] sm:$0xff]
  %v212 = vld [vmem:[%s1 + $0x5b0] sm:$0xff]
  %v213 = vld [vmem:[%s1 + $0x5b8] sm:$0xff]
  %v214 = vld [vmem:[%s1 + $0x5c0] sm:$0xff]
  %v215 = vld [vmem:[%s1 + $0x5c8] sm:$0xff]
  %v216 = vld [vmem:[%s1 + $0x5d0] sm:$0xff]
  %v217 = vld [vmem:[%s1 + $0x5d8] sm:$0xff]
  %v218 = vld [vmem:[%s1 + $0x5e0] sm:$0xff]
  %v219 = vld [vmem:[%s1 + $0x5e8] sm:$0xff]
  %v220 = vld [vmem:[%s1 + $0x5f0] sm:$0xff]
  %v221 = vld [vmem:[%s1 + $0x5f8] sm:$0xff]
  %v222 = vld [vmem:[%s1 + $0x600] sm:$0xff]
  %v223 = vld [vmem:[%s1 + $0x608] sm:$0xff]
  %v224 = vld [vmem:[%s1 + $0x610] sm:$0xff]
  %v225 = vld [vmem:[%s1 + $0x618] sm:$0xff]
  %v226 = vld [vmem:[%s1 + $0x620] sm:$0xff]
  %v227 = vld [vmem:[%s1 + $0x628] sm:$0xff]
  %v228 = vld [vmem:[%s1 + $0x630] sm:$0xff]
  %v229 = vld [vmem:[%s1 + $0x638] sm:$0xff]
  %v230 = vld [vmem:[%s1 + $0x640] sm:$0xff]
  %v231 = vld [vmem:[%s1 + $0x648] sm:$0xff]
  %v232 = vld [vmem:[%s1 + $0x650] sm:$0xff]
  %v233 = vld [vmem:[%s1 + $0x658] sm:$0xff]
  %v234 = vld [vmem:[%s1 + $0x660] sm:$0xff]
  %v235 = vld [vmem:[%s1 + $0x668] sm:$0xff]
  %v236 = vld [vmem:[%s1 + $0x670] sm:$0xff]
  %v237 = vld [vmem:[%s1 + $0x678] sm:$0xff]
  %v238 = vld [vmem:[%s1 + $0x680] sm:$0xff]
  %v239 = vld [vmem:[%s1 + $0x688] sm:$0xff]
  %v240 = vld [vmem:[%s1 + $0x690] sm:$0xff]
  %v241 = vld [vmem:[%s1 + $0x698] sm:$0xff]
  %v242 = vld [vmem:[%s1 + $0x6a0] sm:$0xff]
  %v243 = vld [vmem:[%s1 + $0x6a8] sm:$0xff]
  %v244 = vld [vmem:[%s1 + $0x6b0] sm:$0xff]
  %v245 = vld [vmem:[%s1 + $0x6b8] sm:$0xff]
  %v246 = vld [vmem:[%s1 + $0x6c0] sm:$0xff]
  %v247 = vld [vmem:[%s1 + $0x6c8] sm:$0xff]
  %v248 = vld [vmem:[%s1 + $0x6d0] sm:$0xff]
  %v249 = vld [vmem:[%s1 + $0x6d8] sm:$0xff]
  %v250 = vld [vmem:[%s1 + $0x6e0] sm:$0xff]
  %v251 = vld [vmem:[%s1 + $0x6e8] sm:$0xff]
  %v252 = vld [vmem:[%s1 + $0x6f0] sm:$0xff]
  %v253 = vld [vmem:[%s1 + $0x6f8] sm:$0xff]
  %v254 = vld [vmem:[%s1 + $0x700] sm:$0xff]
  %v255 = vld [vmem:[%s1 + $0x708] sm:$0xff]
  %v256 = vld [vmem:[%s1 + $0x710] sm:$0xff]
  %v257 = vld [vmem:[%s1 + $0x718] sm:$0xff]
  %v258 = vld [vmem:[%s1 + $0x720] sm:$0xff]
  %v259 = vld [vmem:[%s1 + $0x728] sm:$0xff]
  %v260 = vld [vmem:[%s1 + $0x730] sm:$0xff]
  %v261 = vld [vmem:[%s1 + $0x738] sm:$0xff]
  %v262 = vld [vmem:[%s1 + $0x740] sm:$0xff]
  %v263 = vld [vmem:[%s1 + $0x748] sm:$0xff]
  %v264 = vld [vmem:[%s1 + $0x750] sm:$0xff]
  %v265 = vld [vmem:[%s1 + $0x758] sm:$0xff]
  %v266 = vld [vmem:[%s1 + $0x760] sm:$0xff]
  %v267 = vld [vmem:[%s1 + $0x768] sm:$0xff]
  %v268 = vld [vmem:[%s1 + $0x770] sm:$0xff]
  %v269 = vld [vmem:[%s1 + $0x778] sm:$0xff]
  %v270 = vld [vmem:[%s1 + $0x780] sm:$0xff]
  %v271 = vld [vmem:[%s1 + $0x788] sm:$0xff]
  %v272 = vld [vmem:[%s1 + $0x790] sm:$0xff]
  %v273 = vld [vmem:[%s1 + $0x798] sm:$0xff]
  %v274 = vld [vmem:[%s1 + $0x7a0] sm:$0xff]
  %v275 = vld [vmem:[%s1 + $0x7a8] sm:$0xff]
  %v276 = vld [vmem:[%s1 + $0x7b0] sm:$0xff]
  %v277 = vld [vmem:[%s1 + $0x7b8] sm:$0xff]
  %v278 = vld [vmem:[%s1 + $0x7c0] sm:$0xff]
  %v279 = vld [vmem:[%s1 + $0x7c8] sm:$0xff]
  %v280 = vld [vmem:[%s1 + $0x7d0] sm:$0xff]
  %v281 = vld [vmem:[%s1 + $0x7d8] sm:$0xff]
  %v282 = vld [vmem:[%s1 + $0x7e0] sm:$0xff]
  %v283 = vld [vmem:[%s1 + $0x7e8] sm:$0xff]
  %v284 = vld [vmem:[%s1 + $0x7f0] sm:$0xff]
  %v285 = vld [vmem:[%s1 + $0x7f8] sm:$0xff]
  %286 = vmatprep.subr.mxu0 %v91
  %287 = vmatpush1.msra.mxu0 %v90
  %288 = vmatprep.subr.mxu0 %v87
  %289 = vmatpush1.msra.mxu0 %v86
  %290 = vmatprep.subr.mxu0 %v83
  %291 = vmatpush1.msra.mxu0 %v82
  %292 = vmatprep.subr.mxu0 %v79
  %293 = vmatpush1.msra.mxu0 %v78
  %294 = vmatprep.subr.mxu0 %v75
  %295 = vmatpush1.msra.mxu0 %v74
  %296 = vmatprep.subr.mxu0 %v71
  %297 = vmatpush1.msra.mxu0 %v70
  %298 = vmatprep.subr.mxu0 %v67
  %299 = vmatpush1.msra.mxu0 %v66
  %300 = vmatprep.subr.mxu0 %v63
  %301 = vmatpush1.msra.mxu0 %v62
  %302 = vmatprep.subr.mxu0 %v59
  %303 = vmatpush1.msra.mxu0 %v58
  %304 = vmatprep.subr.mxu0 %v55
  %305 = vmatpush1.msra.mxu0 %v54
  %306 = vmatprep.subr.mxu0 %v51
  %307 = vmatpush1.msra.mxu0 %v50
  %308 = vmatprep.subr.mxu0 %v47
  %309 = vmatpush1.msra.mxu0 %v46
  %310 = vmatprep.subr.mxu0 %v43
  %311 = vmatpush1.msra.mxu0 %v42
  %312 = vmatprep.subr.mxu0 %v39
  %313 = vmatpush1.msra.mxu0 %v38
  %314 = vmatprep.subr.mxu0 %v35
  %315 = vmatpush1.msra.mxu0 %v34
  %316 = vmatprep.subr.mxu0 %v31
  %317 = vmatpush1.msra.mxu0 %v30
  %318 = vmatprep.subr.mxu0 %v155
  %319 = vmatpush2.msra.mxu0 %v154
  %320 = vmatprep.subr.mxu0 %v151
  %321 = vmatpush2.msra.mxu0 %v150
  %322 = vmatprep.subr.mxu0 %v147
  %323 = vmatpush2.msra.mxu0 %v146
  %324 = vmatprep.subr.mxu0 %v143
  %325 = vmatpush2.msra.mxu0 %v142
  %326 = vmatprep.subr.mxu0 %v139
  %327 = vmatpush2.msra.mxu0 %v138
  %328 = vmatprep.subr.mxu0 %v135
  %329 = vmatpush2.msra.mxu0 %v134
  %330 = vmatprep.subr.mxu0 %v131
  %331 = vmatpush2.msra.mxu0 %v130
  %332 = vmatprep.subr.mxu0 %v127
  %333 = vmatpush2.msra.mxu0 %v126
  %334 = vmatprep.subr.mxu0 %v123
  %335 = vmatpush2.msra.mxu0 %v122
  %336 = vmatprep.subr.mxu0 %v119
  %337 = vmatpush2.msra.mxu0 %v118
  %338 = vmatprep.subr.mxu0 %v115
  %339 = vmatpush2.msra.mxu0 %v114
  %340 = vmatprep.subr.mxu0 %v111
  %341 = vmatpush2.msra.mxu0 %v110
  %342 = vmatprep.subr.mxu0 %v107
  %343 = vmatpush2.msra.mxu0 %v106
  %344 = vmatprep.subr.mxu0 %v103
  %345 = vmatpush2.msra.mxu0 %v102
  %346 = vmatprep.subr.mxu0 %v99
  %347 = vmatpush2.msra.mxu0 %v98
  %348 = vmatprep.subr.mxu0 %v95
  %349 = vmatpush2.msra.mxu0 %v94
  %350 = vmatprep.mubr.f32.mxu0 %v15
  %351 = vmatmul.mubr.f32.gmra.mxu0 %v14
  %v352 = vpop.f32.mrf.mxu0
  %v353 = vadd.f32 0.0, %v352
  %v354 = vpop.f32.mrf.mxu0
  %v355 = vadd.f32 0.0, %v354
  %356 = vmatprep.mubr.f32.mxu0 %v19
  %357 = vmatmul.mubr.f32.gmra.mxu0 %v18
  %v358 = vpop.f32.mrf.mxu0
  %v359 = vadd.f32 0.0, %v358
  %v360 = vpop.f32.mrf.mxu0
  %v361 = vadd.f32 0.0, %v360
  %362 = vmatprep.mubr.f32.mxu0 %v23
  %363 = vmatmul.mubr.f32.gmra.mxu0 %v22
  %v364 = vpop.f32.mrf.mxu0
  %v365 = vadd.f32 0.0, %v364
  %v366 = vpop.f32.mrf.mxu0
  %v367 = vadd.f32 0.0, %v366
  %368 = vmatprep.mubr.f32.mxu0 %v27
  %369 = vmatmul.mubr.f32.gmra.mxu0 %v26
  %v370 = vpop.f32.mrf.mxu0
  %v371 = vadd.f32 0.0, %v370
  %v372 = vpop.f32.mrf.mxu0
  %v373 = vadd.f32 0.0, %v372
  %374 = vdwg.mxu0
  %375 = vmatprep.subr.mxu0 %v219
  %376 = vmatpush1.msra.mxu0 %v218
  %377 = vmatprep.subr.mxu0 %v215
  %378 = vmatpush1.msra.mxu0 %v214
  %379 = vmatprep.subr.mxu0 %v211
  %380 = vmatpush1.msra.mxu0 %v210
  %381 = vmatprep.subr.mxu0 %v207
  %382 = vmatpush1.msra.mxu0 %v206
  %383 = vmatprep.subr.mxu0 %v203
  %384 = vmatpush1.msra.mxu0 %v202
  %385 = vmatprep.subr.mxu0 %v199
  %386 = vmatpush1.msra.mxu0 %v198
  %387 = vmatprep.subr.mxu0 %v195
  %388 = vmatpush1.msra.mxu0 %v194
  %389 = vmatprep.subr.mxu0 %v191
  %390 = vmatpush1.msra.mxu0 %v190
  %391 = vmatprep.subr.mxu0 %v187
  %392 = vmatpush1.msra.mxu0 %v186
  %393 = vmatprep.subr.mxu0 %v183
  %394 = vmatpush1.msra.mxu0 %v182
  %395 = vmatprep.subr.mxu0 %v179
  %396 = vmatpush1.msra.mxu0 %v178
  %397 = vmatprep.subr.mxu0 %v175
  %398 = vmatpush1.msra.mxu0 %v174
  %399 = vmatprep.subr.mxu0 %v171
  %400 = vmatpush1.msra.mxu0 %v170
  %401 = vmatprep.subr.mxu0 %v167
  %402 = vmatpush1.msra.mxu0 %v166
  %403 = vmatprep.subr.mxu0 %v163
  %404 = vmatpush1.msra.mxu0 %v162
  %405 = vmatprep.subr.mxu0 %v159
  %406 = vmatpush1.msra.mxu0 %v158
  %407 = vmatprep.subr.mxu0 %v283
  %408 = vmatpush2.msra.mxu0 %v282
  %409 = vmatprep.subr.mxu0 %v279
  %410 = vmatpush2.msra.mxu0 %v278
  %411 = vmatprep.subr.mxu0 %v275
  %412 = vmatpush2.msra.mxu0 %v274
  %413 = vmatprep.subr.mxu0 %v271
  %414 = vmatpush2.msra.mxu0 %v270
  %415 = vmatprep.subr.mxu0 %v267
  %416 = vmatpush2.msra.mxu0 %v266
  %417 = vmatprep.subr.mxu0 %v263
  %418 = vmatpush2.msra.mxu0 %v262
  %419 = vmatprep.subr.mxu0 %v259
  %420 = vmatpush2.msra.mxu0 %v258
  %421 = vmatprep.subr.mxu0 %v255
  %422 = vmatpush2.msra.mxu0 %v254
  %423 = vmatprep.subr.mxu0 %v251
  %424 = vmatpush2.msra.mxu0 %v250
  %425 = vmatprep.subr.mxu0 %v247
  %426 = vmatpush2.msra.mxu0 %v246
  %427 = vmatprep.subr.mxu0 %v243
  %428 = vmatpush2.msra.mxu0 %v242
  %429 = vmatprep.subr.mxu0 %v239
  %430 = vmatpush2.msra.mxu0 %v238
  %431 = vmatprep.subr.mxu0 %v235
  %432 = vmatpush2.msra.mxu0 %v234
  %433 = vmatprep.subr.mxu0 %v231
  %434 = vmatpush2.msra.mxu0 %v230
  %435 = vmatprep.subr.mxu0 %v227
  %436 = vmatpush2.msra.mxu0 %v226
  %437 = vmatprep.subr.mxu0 %v223
  %438 = vmatpush2.msra.mxu0 %v222
  %439 = vmatprep.mubr.f32.mxu0 %v17
  %440 = vmatmul.mubr.f32.gmra.mxu0 %v16
  %v441 = vpop.f32.mrf.mxu0
  %v442 = vadd.f32 %v353, %v441
  %v443 = vpop.f32.mrf.mxu0
  %v444 = vadd.f32 %v355, %v443
  %445 = vmatprep.mubr.f32.mxu0 %v21
  %446 = vmatmul.mubr.f32.gmra.mxu0 %v20
  %v447 = vpop.f32.mrf.mxu0
  %v448 = vadd.f32 %v359, %v447
  %v449 = vpop.f32.mrf.mxu0
  %v450 = vadd.f32 %v361, %v449
  %451 = vmatprep.mubr.f32.mxu0 %v25
  %452 = vmatmul.mubr.f32.gmra.mxu0 %v24
  %v453 = vpop.f32.mrf.mxu0
  %v454 = vadd.f32 %v365, %v453
  %v455 = vpop.f32.mrf.mxu0
  %v456 = vadd.f32 %v367, %v455
  %457 = vmatprep.mubr.f32.mxu0 %v29
  %458 = vmatmul.mubr.f32.gmra.mxu0 %v28
  %v459 = vpop.f32.mrf.mxu0
  %v460 = vadd.f32 %v371, %v459
  %v461 = vpop.f32.mrf.mxu0
  %v462 = vadd.f32 %v373, %v461
  %463 = vdwg.mxu0
  %464 = vmatprep.subr.mxu0 %v93
  %465 = vmatpush1.msra.mxu0 %v92
  %466 = vmatprep.subr.mxu0 %v89
  %467 = vmatpush1.msra.mxu0 %v88
  %468 = vmatprep.subr.mxu0 %v85
  %469 = vmatpush1.msra.mxu0 %v84
  %470 = vmatprep.subr.mxu0 %v81
  %471 = vmatpush1.msra.mxu0 %v80
  %472 = vmatprep.subr.mxu0 %v77
  %473 = vmatpush1.msra.mxu0 %v76
  %474 = vmatprep.subr.mxu0 %v73
  %475 = vmatpush1.msra.mxu0 %v72
  %476 = vmatprep.subr.mxu0 %v69
  %477 = vmatpush1.msra.mxu0 %v68
  %478 = vmatprep.subr.mxu0 %v65
  %479 = vmatpush1.msra.mxu0 %v64
  %480 = vmatprep.subr.mxu0 %v61
  %481 = vmatpush1.msra.mxu0 %v60
  %482 = vmatprep.subr.mxu0 %v57
  %483 = vmatpush1.msra.mxu0 %v56
  %484 = vmatprep.subr.mxu0 %v53
  %485 = vmatpush1.msra.mxu0 %v52
  %486 = vmatprep.subr.mxu0 %v49
  %487 = vmatpush1.msra.mxu0 %v48
  %488 = vmatprep.subr.mxu0 %v45
  %489 = vmatpush1.msra.mxu0 %v44
  %490 = vmatprep.subr.mxu0 %v41
  %491 = vmatpush1.msra.mxu0 %v40
  %492 = vmatprep.subr.mxu0 %v37
  %493 = vmatpush1.msra.mxu0 %v36
  %494 = vmatprep.subr.mxu0 %v33
  %495 = vmatpush1.msra.mxu0 %v32
  %496 = vmatprep.subr.mxu0 %v157
  %497 = vmatpush2.msra.mxu0 %v156
  %498 = vmatprep.subr.mxu0 %v153
  %499 = vmatpush2.msra.mxu0 %v152
  %500 = vmatprep.subr.mxu0 %v149
  %501 = vmatpush2.msra.mxu0 %v148
  %502 = vmatprep.subr.mxu0 %v145
  %503 = vmatpush2.msra.mxu0 %v144
  %504 = vmatprep.subr.mxu0 %v141
  %505 = vmatpush2.msra.mxu0 %v140
  %506 = vmatprep.subr.mxu0 %v137
  %507 = vmatpush2.msra.mxu0 %v136
  %508 = vmatprep.subr.mxu0 %v133
  %509 = vmatpush2.msra.mxu0 %v132
  %510 = vmatprep.subr.mxu0 %v129
  %511 = vmatpush2.msra.mxu0 %v128
  %512 = vmatprep.subr.mxu0 %v125
  %513 = vmatpush2.msra.mxu0 %v124
  %514 = vmatprep.subr.mxu0 %v121
  %515 = vmatpush2.msra.mxu0 %v120
  %516 = vmatprep.subr.mxu0 %v117
  %517 = vmatpush2.msra.mxu0 %v116
  %518 = vmatprep.subr.mxu0 %v113
  %519 = vmatpush2.msra.mxu0 %v112
  %520 = vmatprep.subr.mxu0 %v109
  %521 = vmatpush2.msra.mxu0 %v108
  %522 = vmatprep.subr.mxu0 %v105
  %523 = vmatpush2.msra.mxu0 %v104
  %524 = vmatprep.subr.mxu0 %v101
  %525 = vmatpush2.msra.mxu0 %v100
  %526 = vmatprep.subr.mxu0 %v97
  %527 = vmatpush2.msra.mxu0 %v96
  %528 = vmatprep.mubr.f32.mxu0 %v15
  %529 = vmatmul.mubr.f32.gmra.mxu0 %v14
  %v530 = vpop.f32.mrf.mxu0
  %v531 = vadd.f32 0.0, %v530
  %v532 = vpop.f32.mrf.mxu0
  %v533 = vadd.f32 0.0, %v532
  %534 = vmatprep.mubr.f32.mxu0 %v19
  %535 = vmatmul.mubr.f32.gmra.mxu0 %v18
  %v536 = vpop.f32.mrf.mxu0
  %v537 = vadd.f32 0.0, %v536
  %v538 = vpop.f32.mrf.mxu0
  %v539 = vadd.f32 0.0, %v538
  %540 = vmatprep.mubr.f32.mxu0 %v23
  %541 = vmatmul.mubr.f32.gmra.mxu0 %v22
  %v542 = vpop.f32.mrf.mxu0
  %v543 = vadd.f32 0.0, %v542
  %v544 = vpop.f32.mrf.mxu0
  %v545 = vadd.f32 0.0, %v544
  %546 = vmatprep.mubr.f32.mxu0 %v27
  %547 = vmatmul.mubr.f32.gmra.mxu0 %v26
  %v548 = vpop.f32.mrf.mxu0
  %v549 = vadd.f32 0.0, %v548
  %v550 = vpop.f32.mrf.mxu0
  %v551 = vadd.f32 0.0, %v550
  %552 = vdwg.mxu0
  %553 = vmatprep.subr.mxu0 %v221
  %554 = vmatpush1.msra.mxu0 %v220
  %555 = vmatprep.subr.mxu0 %v217
  %556 = vmatpush1.msra.mxu0 %v216
  %557 = vmatprep.subr.mxu0 %v213
  %558 = vmatpush1.msra.mxu0 %v212
  %559 = vmatprep.subr.mxu0 %v209
  %560 = vmatpush1.msra.mxu0 %v208
  %561 = vmatprep.subr.mxu0 %v205
  %562 = vmatpush1.msra.mxu0 %v204
  %563 = vmatprep.subr.mxu0 %v201
  %564 = vmatpush1.msra.mxu0 %v200
  %565 = vmatprep.subr.mxu0 %v197
  %566 = vmatpush1.msra.mxu0 %v196
  %567 = vmatprep.subr.mxu0 %v193
  %568 = vmatpush1.msra.mxu0 %v192
  %569 = vmatprep.subr.mxu0 %v189
  %570 = vmatpush1.msra.mxu0 %v188
  %571 = vmatprep.subr.mxu0 %v185
  %572 = vmatpush1.msra.mxu0 %v184
  %573 = vmatprep.subr.mxu0 %v181
  %574 = vmatpush1.msra.mxu0 %v180
  %575 = vmatprep.subr.mxu0 %v177
  %576 = vmatpush1.msra.mxu0 %v176
  %577 = vmatprep.subr.mxu0 %v173
  %578 = vmatpush1.msra.mxu0 %v172
  %579 = vmatprep.subr.mxu0 %v169
  %580 = vmatpush1.msra.mxu0 %v168
  %581 = vmatprep.subr.mxu0 %v165
  %582 = vmatpush1.msra.mxu0 %v164
  %583 = vmatprep.subr.mxu0 %v161
  %584 = vmatpush1.msra.mxu0 %v160
  %585 = vmatprep.subr.mxu0 %v285
  %586 = vmatpush2.msra.mxu0 %v284
  %587 = vmatprep.subr.mxu0 %v281
  %588 = vmatpush2.msra.mxu0 %v280
  %589 = vmatprep.subr.mxu0 %v277
  %590 = vmatpush2.msra.mxu0 %v276
  %591 = vmatprep.subr.mxu0 %v273
  %592 = vmatpush2.msra.mxu0 %v272
  %593 = vmatprep.subr.mxu0 %v269
  %594 = vmatpush2.msra.mxu0 %v268
  %595 = vmatprep.subr.mxu0 %v265
  %596 = vmatpush2.msra.mxu0 %v264
  %597 = vmatprep.subr.mxu0 %v261
  %598 = vmatpush2.msra.mxu0 %v260
  %599 = vmatprep.subr.mxu0 %v257
  %600 = vmatpush2.msra.mxu0 %v256
  %601 = vmatprep.subr.mxu0 %v253
  %602 = vmatpush2.msra.mxu0 %v252
  %603 = vmatprep.subr.mxu0 %v249
  %604 = vmatpush2.msra.mxu0 %v248
  %605 = vmatprep.subr.mxu0 %v245
  %606 = vmatpush2.msra.mxu0 %v244
  %607 = vmatprep.subr.mxu0 %v241
  %608 = vmatpush2.msra.mxu0 %v240
  %609 = vmatprep.subr.mxu0 %v237
  %610 = vmatpush2.msra.mxu0 %v236
  %611 = vmatprep.subr.mxu0 %v233
  %612 = vmatpush2.msra.mxu0 %v232
  %613 = vmatprep.subr.mxu0 %v229
  %614 = vmatpush2.msra.mxu0 %v228
  %615 = vmatprep.subr.mxu0 %v225
  %616 = vmatpush2.msra.mxu0 %v224
  %617 = vmatprep.mubr.f32.mxu0 %v17
  %618 = vmatmul.mubr.f32.gmra.mxu0 %v16
  %v619 = vpop.f32.mrf.mxu0
  %v620 = vadd.f32 %v531, %v619
  %v621 = vpop.f32.mrf.mxu0
  %v622 = vadd.f32 %v533, %v621
  %623 = vmatprep.mubr.f32.mxu0 %v21
  %624 = vmatmul.mubr.f32.gmra.mxu0 %v20
  %v625 = vpop.f32.mrf.mxu0
  %v626 = vadd.f32 %v537, %v625
  %v627 = vpop.f32.mrf.mxu0
  %v628 = vadd.f32 %v539, %v627
  %629 = vmatprep.mubr.f32.mxu0 %v25
  %630 = vmatmul.mubr.f32.gmra.mxu0 %v24
  %v631 = vpop.f32.mrf.mxu0
  %v632 = vadd.f32 %v543, %v631
  %v633 = vpop.f32.mrf.mxu0
  %v634 = vadd.f32 %v545, %v633
  %635 = vmatprep.mubr.f32.mxu0 %v29
  %636 = vmatmul.mubr.f32.gmra.mxu0 %v28
  %v637 = vpop.f32.mrf.mxu0
  %v638 = vadd.f32 %v549, %v637
  %v639 = vpop.f32.mrf.mxu0
  %v640 = vadd.f32 %v551, %v639
  %641 = vdwg.mxu0
  %v642 = vmul.f32 %v442, %v442
  %v643 = vmul.f32 %v444, %v444
  %v644 = vmul.f32 %v448, %v448
  %v645 = vmul.f32 %v450, %v450
  %v646 = vmul.f32 %v454, %v454
  %v647 = vmul.f32 %v456, %v456
  %v648 = vmul.f32 %v460, %v460
  %v649 = vmul.f32 %v462, %v462
  %v650 = vmul.f32 %v620, %v620
  %v651 = vmul.f32 %v622, %v622
  %v652 = vmul.f32 %v626, %v626
  %v653 = vmul.f32 %v628, %v628
  %v654 = vmul.f32 %v632, %v632
  %v655 = vmul.f32 %v634, %v634
  %v656 = vmul.f32 %v638, %v638
  %v657 = vmul.f32 %v640, %v640
  %v658 = vadd.f32 %v642, %v650
  %v659 = vadd.f32 %v643, %v651
  %v660 = vadd.f32 %v644, %v652
  %v661 = vadd.f32 %v645, %v653
  %v662 = vadd.f32 %v646, %v654
  %v663 = vadd.f32 %v647, %v655
  %v664 = vadd.f32 %v648, %v656
  %v665 = vadd.f32 %v649, %v657
  %v666 = vld [vmem:[%s2] sm:$0xff]
  %v667 = vld [vmem:[%s2 + $0x8] sm:$0xff]
  %v668 = vld [vmem:[%s2 + $0x10] sm:$0xff]
  %v669 = vld [vmem:[%s2 + $0x18] sm:$0xff]
  %v670 = vld [vmem:[%s2 + $0x20] sm:$0xff]
  %v671 = vld [vmem:[%s2 + $0x28] sm:$0xff]
  %v672 = vld [vmem:[%s2 + $0x30] sm:$0xff]
  %v673 = vld [vmem:[%s2 + $0x38] sm:$0xff]
  %v674 = vld [vmem:[%s2 + $0x40] sm:$0xff]
  %v675 = vld [vmem:[%s2 + $0x48] sm:$0xff]
  %v676 = vld [vmem:[%s2 + $0x50] sm:$0xff]
  %v677 = vld [vmem:[%s2 + $0x58] sm:$0xff]
  %v678 = vld [vmem:[%s2 + $0x60] sm:$0xff]
  %v679 = vld [vmem:[%s2 + $0x68] sm:$0xff]
  %v680 = vld [vmem:[%s2 + $0x70] sm:$0xff]
  %v681 = vld [vmem:[%s2 + $0x78] sm:$0xff]
  %v682 = vld [vmem:[%s2 + $0x80] sm:$0xff]
  %v683 = vld [vmem:[%s2 + $0x88] sm:$0xff]
  %v684 = vld [vmem:[%s2 + $0x90] sm:$0xff]
  %v685 = vld [vmem:[%s2 + $0x98] sm:$0xff]
  %v686 = vld [vmem:[%s2 + $0xa0] sm:$0xff]
  %v687 = vld [vmem:[%s2 + $0xa8] sm:$0xff]
  %v688 = vld [vmem:[%s2 + $0xb0] sm:$0xff]
  %v689 = vld [vmem:[%s2 + $0xb8] sm:$0xff]
  %v690 = vld [vmem:[%s2 + $0xc0] sm:$0xff]
  %v691 = vld [vmem:[%s2 + $0xc8] sm:$0xff]
  %v692 = vld [vmem:[%s2 + $0xd0] sm:$0xff]
  %v693 = vld [vmem:[%s2 + $0xd8] sm:$0xff]
  %v694 = vld [vmem:[%s2 + $0xe0] sm:$0xff]
  %v695 = vld [vmem:[%s2 + $0xe8] sm:$0xff]
  %v696 = vld [vmem:[%s2 + $0xf0] sm:$0xff]
  %v697 = vld [vmem:[%s2 + $0xf8] sm:$0xff]
  %698 = vmatprep.subr.mxu0 0.0
  %699 = vmatpush1.msra.mxu0 %v681
  %700 = vmatprep.subr.mxu0 0.0
  %701 = vmatpush1.msra.mxu0 %v680
  %702 = vmatprep.subr.mxu0 0.0
  %703 = vmatpush1.msra.mxu0 %v679
  %704 = vmatprep.subr.mxu0 0.0
  %705 = vmatpush1.msra.mxu0 %v678
  %706 = vmatprep.subr.mxu0 0.0
  %707 = vmatpush1.msra.mxu0 %v677
  %708 = vmatprep.subr.mxu0 0.0
  %709 = vmatpush1.msra.mxu0 %v676
  %710 = vmatprep.subr.mxu0 0.0
  %711 = vmatpush1.msra.mxu0 %v675
  %712 = vmatprep.subr.mxu0 0.0
  %713 = vmatpush1.msra.mxu0 %v674
  %714 = vmatprep.subr.mxu0 0.0
  %715 = vmatpush1.msra.mxu0 %v673
  %716 = vmatprep.subr.mxu0 0.0
  %717 = vmatpush1.msra.mxu0 %v672
  %718 = vmatprep.subr.mxu0 0.0
  %719 = vmatpush1.msra.mxu0 %v671
  %720 = vmatprep.subr.mxu0 0.0
  %721 = vmatpush1.msra.mxu0 %v670
  %722 = vmatprep.subr.mxu0 0.0
  %723 = vmatpush1.msra.mxu0 %v669
  %724 = vmatprep.subr.mxu0 0.0
  %725 = vmatpush1.msra.mxu0 %v668
  %726 = vmatprep.subr.mxu0 0.0
  %727 = vmatpush1.msra.mxu0 %v667
  %728 = vmatprep.subr.mxu0 0.0
  %729 = vmatpush1.msra.mxu0 %v666
  %730 = vmatprep.subr.mxu0 0.0
  %731 = vmatpush2.msra.mxu0 %v697
  %732 = vmatprep.subr.mxu0 0.0
  %733 = vmatpush2.msra.mxu0 %v696
  %734 = vmatprep.subr.mxu0 0.0
  %735 = vmatpush2.msra.mxu0 %v695
  %736 = vmatprep.subr.mxu0 0.0
  %737 = vmatpush2.msra.mxu0 %v694
  %738 = vmatprep.subr.mxu0 0.0
  %739 = vmatpush2.msra.mxu0 %v693
  %740 = vmatprep.subr.mxu0 0.0
  %741 = vmatpush2.msra.mxu0 %v692
  %742 = vmatprep.subr.mxu0 0.0
  %743 = vmatpush2.msra.mxu0 %v691
  %744 = vmatprep.subr.mxu0 0.0
  %745 = vmatpush2.msra.mxu0 %v690
  %746 = vmatprep.subr.mxu0 0.0
  %747 = vmatpush2.msra.mxu0 %v689
  %748 = vmatprep.subr.mxu0 0.0
  %749 = vmatpush2.msra.mxu0 %v688
  %750 = vmatprep.subr.mxu0 0.0
  %751 = vmatpush2.msra.mxu0 %v687
  %752 = vmatprep.subr.mxu0 0.0
  %753 = vmatpush2.msra.mxu0 %v686
  %754 = vmatprep.subr.mxu0 0.0
  %755 = vmatpush2.msra.mxu0 %v685
  %756 = vmatprep.subr.mxu0 0.0
  %757 = vmatpush2.msra.mxu0 %v684
  %758 = vmatprep.subr.mxu0 0.0
  %759 = vmatpush2.msra.mxu0 %v683
  %760 = vmatprep.subr.mxu0 0.0
  %761 = vmatpush2.msra.mxu0 %v682
  %762 = vmatprep.mubr.f32.mxu0 %v659
  %763 = vmatmul.mubr.f32.gmra.mxu0 %v658
  %v764 = vpop.f32.mrf.mxu0
  %v765 = vadd.f32 0.0, %v764
  %v766 = vpop.f32.mrf.mxu0
  %767 = vmatprep.mubr.f32.mxu0 %v661
  %768 = vmatmul.mubr.f32.gmra.mxu0 %v660
  %v769 = vpop.f32.mrf.mxu0
  %v770 = vadd.f32 0.0, %v769
  %v771 = vpop.f32.mrf.mxu0
  %772 = vmatprep.mubr.f32.mxu0 %v663
  %773 = vmatmul.mubr.f32.gmra.mxu0 %v662
  %v774 = vpop.f32.mrf.mxu0
  %v775 = vadd.f32 0.0, %v774
  %v776 = vpop.f32.mrf.mxu0
  %777 = vmatprep.mubr.f32.mxu0 %v665
  %778 = vmatmul.mubr.f32.gmra.mxu0 %v664
  %v779 = vpop.f32.mrf.mxu0
  %v780 = vadd.f32 0.0, %v779
  %v781 = vpop.f32.mrf.mxu0
  %782 = vdwg.mxu0
  %783 = vst [vmem:[%s3] sm:$0xff] %v765
  %784 = vst [vmem:[%s3 + $0x8] sm:$0xff] %v770
  %785 = vst [vmem:[%s3 + $0x10] sm:$0xff] %v775
  %786 = vst [vmem:[%s3 + $0x18] sm:$0xff] %v780
  // Predicated region
  $region14: #{mel_spec.1} parent=0 // pred_check
    _
  $region15: #{mel_spec.1} parent=0 // pred_check_branch
    %788 = sbr.rel (0) target = $region17
  $region16: #{mel_spec.1} parent=0 // pred_region
    _
  $region17: #{mel_spec.1} parent=0 // pred_fallthru
    _
  // Predicated region
  $region18: #{mel_spec.1} parent=0 // pred_check
    _
  $region19: #{mel_spec.1} parent=0 // pred_check_branch
    %790 = sbr.rel (0) target = $region21
  $region20: #{mel_spec.1} parent=0 // pred_region
    _
  $region21: #{mel_spec.1} parent=0 // pred_fallthru
    _

</llo_original>
